<compile_context>
chip_gen: v7x
topology: tpu7x:2x2x1
jax: 0.10.0
libtpu: 0.0.40
codegen_flags: <defaults>
</compile_context>

<pallas_src>
import functools
import math

import numpy as np
import jax
import jax.numpy as jnp
from jax.experimental import pallas as pl
from jax.experimental.pallas import tpu as pltpu

LN_EPS = 1e-5                          # PyTorch nn.LayerNorm default
VMEM_LIMIT_BYTES = 48 * 1024 * 1024    # > scoped defaults (16/32 MiB), < v7x 64 MiB physical


def _rows_target():
    """MXU row target: 256 fills the 256-wide MXU on v6e/v7x, 128 suffices on v5e."""
    try:
        kind = jax.devices()[0].device_kind.lower()
        if "v5e" in kind or "v5 lite" in kind or "v5litepod" in kind:
            return 128
    except Exception:
        pass
    return 256


@functools.lru_cache(maxsize=None)
def _const_block_kwargs():
    """BlockSpec kwargs requesting a single VMEM buffer for grid-constant operands.

    Weight/bias blocks have a constant index_map, so double-buffering them only
    wastes VMEM.  Probe once whether this JAX/Mosaic build honors
    pipeline_mode=pl.Buffered(1); fall back to default buffering otherwise.
    """
    def _copy(x_ref, o_ref):
        o_ref[...] = x_ref[...]

    try:
        kwargs = dict(pipeline_mode=pl.Buffered(buffer_count=1))
        probe = pl.pallas_call(
            _copy,
            grid=(2,),
            in_specs=[pl.BlockSpec((8, 128), lambda i: (0, 0), **kwargs)],
            out_specs=pl.BlockSpec((8, 128), lambda i: (0, 0)),
            out_shape=jax.ShapeDtypeStruct((8, 128), jnp.float32),
        )(jnp.zeros((8, 128), jnp.float32))
        jax.block_until_ready(probe)
        return kwargs
    except Exception:
        return {}


# ---------------------------------------------------------------------------
# Fused kernel: LayerNorm -> QKV -> per-head attention -> Wo -> residual
# ---------------------------------------------------------------------------
def _mhsa_kernel(x_ref, lng_ref, lnb_ref, wqkv_ref, bqkv_ref, wo_ref, bo_ref,
                 o_ref, ctx_ref, *, num_heads, scale):
    bb, t, d = x_ref.shape
    rows = bb * t
    dh = d // num_heads

    # Merge the Bb sequences into one row block (leading-dim reshape only).
    x = x_ref[...].reshape(rows, d).astype(jnp.float32)            # (R, D)

    # ---- LayerNorm over channels (f32 on the VPU, rsqrt on the EUP) -------
    mu = jnp.mean(x, axis=-1, keepdims=True)
    xc = x - mu
    var = jnp.mean(xc * xc, axis=-1, keepdims=True)
    xn = xc * jax.lax.rsqrt(var + LN_EPS) * lng_ref[...] + lnb_ref[...]

    # ---- fused QKV projection: one (R,D)@(D,3D) MXU matmul, bf16 in / f32 acc
    qkv = jnp.dot(xn.astype(jnp.bfloat16), wqkv_ref[...],
                  preferred_element_type=jnp.float32) + bqkv_ref[...]   # (R, 3D)

    # Slice Q/K/V at D-aligned lane boundaries, cast to bf16 ONCE, and view
    # per sequence as (Bb, T, D).  Softmax scale is folded into q.
    q = (qkv[:, :d] * scale).astype(jnp.bfloat16).reshape(bb, t, d)
    k = qkv[:, d:2 * d].astype(jnp.bfloat16).reshape(bb, t, d)
    v = qkv[:, 2 * d:3 * d].astype(jnp.bfloat16).reshape(bb, t, d)

    # ---- per-head attention, batched over the Bb sequences -----------------
    # Each head's PV result goes straight into the VMEM scratch `ctx_ref`, so
    # only one head's score matrix is live at a time (no list + lane concat).
    for h in range(num_heads):
        lo, hi = h * dh, (h + 1) * dh
        qh, kh, vh = q[:, :, lo:hi], k[:, :, lo:hi], v[:, :, lo:hi]  # (Bb, T, dh) bf16
        s = jnp.einsum("bqd,bkd->bqk", qh, kh,
                       preferred_element_type=jnp.float32)           # (Bb, T, T) f32
        s = s - jnp.max(s, axis=-1, keepdims=True)
        p = jnp.exp(s)
        denom = jnp.sum(p, axis=-1, keepdims=True)
        inv = pl.reciprocal(denom, approx=True)      # EUP slot
        inv = inv * (2.0 - denom * inv)              # one Newton step -> ~exact
        p = p * inv
        ctx_ref[:, :, lo:hi] = jnp.einsum(
            "bqk,bkd->bqd", p.astype(jnp.bfloat16), vh,
            preferred_element_type=jnp.float32)                      # (Bb, T, dh)

    # ---- output projection + residual (dropouts are identity in eval mode) -
    ctx = ctx_ref[...].reshape(rows, d).astype(jnp.bfloat16)         # merged heads
    out = jnp.dot(ctx, wo_ref[...], preferred_element_type=jnp.float32) + bo_ref[...]
    o_ref[...] = (x + out).reshape(bb, t, d).astype(o_ref.dtype)


def mhsa_forward(x, params, *, num_heads):
    b, t, d = x.shape
    dh = d // num_heads
    scale = 1.0 / math.sqrt(dh)

    # Rows per grid step: fill the MXU (~256 rows v6e/v7x, ~128 v5e) but keep
    # at least two grid steps whenever b >= 2 so both v7x TensorCores get work.
    bb = max(1, min(b, _rows_target() // max(t, 1)))
    if b >= 2:
        bb = min(bb, pl.cdiv(b, 2))
    grid = (pl.cdiv(b, bb),)

    const = _const_block_kwargs()    # single-buffer the grid-constant operands

    # Advisory cost hint for the XLA scheduler.
    flops = int(b * (8 * t * d * d + 4 * t * t * d))
    transcendentals = int(b * (num_heads * t * t + (num_heads + 1) * t))
    bytes_accessed = int(2 * b * t * d * 4                    # x in, y out (f32)
                         + (3 * d * d + d * d) * 2            # bf16 weights
                         + (3 * d + d + 2 * d) * 4)           # f32 biases / LN

    return pl.pallas_call(
        functools.partial(_mhsa_kernel, num_heads=num_heads, scale=scale),
        grid=grid,
        in_specs=[
            pl.BlockSpec((bb, t, d), lambda i: (i, 0, 0)),          # x block
            pl.BlockSpec((1, d), lambda i: (0, 0), **const),        # LayerNorm gamma
            pl.BlockSpec((1, d), lambda i: (0, 0), **const),        # LayerNorm beta
            pl.BlockSpec((d, 3 * d), lambda i: (0, 0), **const),    # fused QKV weight (bf16)
            pl.BlockSpec((1, 3 * d), lambda i: (0, 0), **const),    # fused QKV bias
            pl.BlockSpec((d, d), lambda i: (0, 0), **const),        # out-proj weight (bf16)
            pl.BlockSpec((1, d), lambda i: (0, 0), **const),        # out-proj bias
        ],
        out_specs=pl.BlockSpec((bb, t, d), lambda i: (i, 0, 0)),
        out_shape=jax.ShapeDtypeStruct((b, t, d), jnp.float32),
        scratch_shapes=[pltpu.VMEM((bb, t, d), jnp.float32)],        # merged-head ctx
        compiler_params=pltpu.CompilerParams(
            dimension_semantics=("parallel",),
            vmem_limit_bytes=VMEM_LIMIT_BYTES),
        cost_estimate=pl.CostEstimate(flops=flops,
                                      transcendentals=transcendentals,
                                      bytes_accessed=bytes_accessed),
    )(x, params["ln_g"], params["ln_b"], params["wqkv"], params["bqkv"],
      params["wo"], params["bo"])


# ---------------------------------------------------------------------------
# Pure-JAX reference (PyTorch nn.MultiheadAttention semantics, eval mode)
# ---------------------------------------------------------------------------
def mhsa_reference(x, params, num_heads):
    b, t, d = x.shape
    dh = d // num_heads
    mu = jnp.mean(x, axis=-1, keepdims=True)
    var = jnp.mean((x - mu) ** 2, axis=-1, keepdims=True)
    xn = (x - mu) / jnp.sqrt(var + LN_EPS) * params["ln_g"] + params["ln_b"]
    qkv = jnp.einsum("btd,de->bte", xn, params["wqkv"].astype(jnp.float32)) + params["bqkv"]
    q, k, v = jnp.split(qkv, 3, axis=-1)
    split = lambda a: a.reshape(b, t, num_heads, dh).transpose(0, 2, 1, 3)
    q, k, v = split(q), split(k), split(v)
    s = jnp.einsum("bhqe,bhke->bhqk", q, k) / math.sqrt(dh)
    p = jax.nn.softmax(s, axis=-1)
    ctx = jnp.einsum("bhqk,bhke->bhqe", p, v).transpose(0, 2, 1, 3).reshape(b, t, d)
    out = jnp.einsum("btd,de->bte", ctx, params["wo"].astype(jnp.float32)) + params["bo"]
    return x + out


# ---------------------------------------------------------------------------
# Deterministic parameter construction (weights stored in bf16 for the MXU)
# ---------------------------------------------------------------------------
def init_params(key, dim_model):
    d = dim_model
    k1, k2, k3, k4 = jax.random.split(key, 4)
    wqkv = (jax.random.normal(k1, (d, 3 * d), jnp.float32) / math.sqrt(d)).astype(jnp.bfloat16)
    wo = (jax.random.normal(k3, (d, d), jnp.float32) / math.sqrt(d)).astype(jnp.bfloat16)
    bqkv = 0.01 * jax.random.normal(k2, (1, 3 * d), jnp.float32)
    bo = 0.01 * jax.random.normal(k4, (1, d), jnp.float32)
    return {
        "ln_g": jnp.ones((1, d), jnp.float32),
        "ln_b": jnp.zeros((1, d), jnp.float32),
        "wqkv": wqkv,   # columns [0:D]=Q, [D:2D]=K, [2D:3D]=V (x @ W_in^T layout)
        "bqkv": bqkv,
        "wo": wo,       # already transposed: out = ctx @ wo + bo
        "bo": bo,
    }


# ---------------------------------------------------------------------------
if __name__ == "__main__":
    B, T, DIM_MODEL, NUM_HEADS = 2, 8, 32, 4

    root = jax.random.PRNGKey(0)
    k_param, k_x = jax.random.split(root)
    params = init_params(k_param, DIM_MODEL)
    x = jax.random.normal(k_x, (B, T, DIM_MODEL), dtype=jnp.float32)

    fwd = jax.jit(functools.partial(mhsa_forward, num_heads=NUM_HEADS))
    out = fwd(x, params)
    jax.block_until_ready(out)

    assert out.shape == (B, T, DIM_MODEL)
    ref = mhsa_reference(x, params, NUM_HEADS)
    # Tolerance accounts for bf16 MXU inputs (accumulation and softmax are f32).
    np.testing.assert_allclose(np.asarray(out), np.asarray(ref), rtol=3e-2, atol=3e-2)
    print("KERNEL_OK")
</pallas_src>

<mosaic_0001>
module attributes {stable_mosaic.version = 11 : i64} {
  func.func @_mhsa_kernel(%arg0: i32, %arg1: memref<1x8x32xf32, #tpu.memory_space<vmem>>, %arg2: memref<1x32xf32, #tpu.memory_space<vmem>>, %arg3: memref<1x32xf32, #tpu.memory_space<vmem>>, %arg4: memref<32x96xbf16, #tpu.memory_space<vmem>>, %arg5: memref<1x96xf32, #tpu.memory_space<vmem>>, %arg6: memref<32x32xbf16, #tpu.memory_space<vmem>>, %arg7: memref<1x32xf32, #tpu.memory_space<vmem>>, %arg8: memref<1x8x32xf32, #tpu.memory_space<vmem>>, %arg9: memref<1x8x32xf32, #tpu.memory_space<vmem>>) attributes {dimension_semantics = [#tpu.dimension_semantics<parallel>], iteration_bounds = array<i64: 2>, scalar_prefetch = 0 : i64, scratch_operands = 1 : i64, tpu.core_type = #tpu.core_type<tc>, window_params = [{transform_indices = @transform_0, window_bounds = array<i64: 1, 8, 32>}, {pipeline_mode = #tpu.pipeline_mode<synchronous>, transform_indices = @transform_1, window_bounds = array<i64: 1, 32>}, {pipeline_mode = #tpu.pipeline_mode<synchronous>, transform_indices = @transform_2, window_bounds = array<i64: 1, 32>}, {pipeline_mode = #tpu.pipeline_mode<synchronous>, transform_indices = @transform_3, window_bounds = array<i64: 32, 96>}, {pipeline_mode = #tpu.pipeline_mode<synchronous>, transform_indices = @transform_4, window_bounds = array<i64: 1, 96>}, {pipeline_mode = #tpu.pipeline_mode<synchronous>, transform_indices = @transform_5, window_bounds = array<i64: 32, 32>}, {pipeline_mode = #tpu.pipeline_mode<synchronous>, transform_indices = @transform_6, window_bounds = array<i64: 1, 32>}, {transform_indices = @transform_7, window_bounds = array<i64: 1, 8, 32>}]} {
    %c0 = arith.constant 0 : index
    %c0_0 = arith.constant 0 : index
    %c0_1 = arith.constant 0 : index
    %0 = vector.load %arg1[%c0, %c0_0, %c0_1] : memref<1x8x32xf32, #tpu.memory_space<vmem>>, vector<1x8x32xf32>
    %1 = vector.shape_cast %0 : vector<1x8x32xf32> to vector<8x32xf32>
    %cst = arith.constant dense<0.000000e+00> : vector<8xf32>
    %2 = vector.multi_reduction <add>, %1, %cst [1] : vector<8x32xf32> to vector<8xf32>
    %3 = vector.shape_cast %2 : vector<8xf32> to vector<8x1xf32>
    %cst_2 = arith.constant 3.200000e+01 : f32
    %4 = vector.broadcast %cst_2 : f32 to vector<8x1xf32>
    %5 = arith.divf %3, %4 : vector<8x1xf32>
    %6 = vector.broadcast %5 : vector<8x1xf32> to vector<8x32xf32>
    %7 = arith.subf %1, %6 : vector<8x32xf32>
    %8 = arith.mulf %7, %7 : vector<8x32xf32>
    %cst_3 = arith.constant dense<0.000000e+00> : vector<8xf32>
    %9 = vector.multi_reduction <add>, %8, %cst_3 [1] : vector<8x32xf32> to vector<8xf32>
    %10 = vector.shape_cast %9 : vector<8xf32> to vector<8x1xf32>
    %cst_4 = arith.constant 3.200000e+01 : f32
    %11 = vector.broadcast %cst_4 : f32 to vector<8x1xf32>
    %12 = arith.divf %10, %11 : vector<8x1xf32>
    %cst_5 = arith.constant 9.99999974E-6 : f32
    %13 = vector.broadcast %cst_5 : f32 to vector<8x1xf32>
    %14 = arith.addf %12, %13 : vector<8x1xf32>
    %15 = math.rsqrt %14 : vector<8x1xf32>
    %16 = vector.broadcast %15 : vector<8x1xf32> to vector<8x32xf32>
    %17 = arith.mulf %7, %16 : vector<8x32xf32>
    %c0_6 = arith.constant 0 : index
    %c0_7 = arith.constant 0 : index
    %18 = vector.load %arg2[%c0_6, %c0_7] : memref<1x32xf32, #tpu.memory_space<vmem>>, vector<1x32xf32>
    %19 = vector.broadcast %18 : vector<1x32xf32> to vector<8x32xf32>
    %20 = arith.mulf %17, %19 : vector<8x32xf32>
    %c0_8 = arith.constant 0 : index
    %c0_9 = arith.constant 0 : index
    %21 = vector.load %arg3[%c0_8, %c0_9] : memref<1x32xf32, #tpu.memory_space<vmem>>, vector<1x32xf32>
    %22 = vector.broadcast %21 : vector<1x32xf32> to vector<8x32xf32>
    %23 = arith.addf %20, %22 : vector<8x32xf32>
    %24 = arith.truncf %23 : vector<8x32xf32> to vector<8x32xbf16>
    %c0_10 = arith.constant 0 : index
    %c0_11 = arith.constant 0 : index
    %25 = vector.load %arg4[%c0_10, %c0_11] : memref<32x96xbf16, #tpu.memory_space<vmem>>, vector<32x96xbf16>
    %cst_12 = arith.constant dense<0.000000e+00> : vector<8x96xf32>
    %26 = tpu.matmul %24, %25, %cst_12 {dimension_numbers = #tpu.dot_dimension_numbers<[1], [0], [0], [1], [0, 0, 1, 1], [], []>} : vector<8x32xbf16>, vector<32x96xbf16>, vector<8x96xf32> -> vector<8x96xf32>
    %c0_13 = arith.constant 0 : index
    %c0_14 = arith.constant 0 : index
    %27 = vector.load %arg5[%c0_13, %c0_14] : memref<1x96xf32, #tpu.memory_space<vmem>>, vector<1x96xf32>
    %28 = vector.broadcast %27 : vector<1x96xf32> to vector<8x96xf32>
    %29 = arith.addf %26, %28 : vector<8x96xf32>
    %30 = vector.extract_strided_slice %29 {offsets = [0, 0], sizes = [8, 32], strides = [1, 1]} : vector<8x96xf32> to vector<8x32xf32>
    %cst_15 = arith.constant 0.353553385 : f32
    %31 = vector.broadcast %cst_15 : f32 to vector<8x32xf32>
    %32 = arith.mulf %30, %31 : vector<8x32xf32>
    %33 = arith.truncf %32 : vector<8x32xf32> to vector<8x32xbf16>
    %34 = vector.shape_cast %33 : vector<8x32xbf16> to vector<1x8x32xbf16>
    %35 = vector.extract_strided_slice %29 {offsets = [0, 32], sizes = [8, 32], strides = [1, 1]} : vector<8x96xf32> to vector<8x32xf32>
    %36 = arith.truncf %35 : vector<8x32xf32> to vector<8x32xbf16>
    %37 = vector.shape_cast %36 : vector<8x32xbf16> to vector<1x8x32xbf16>
    %38 = vector.extract_strided_slice %29 {offsets = [0, 64], sizes = [8, 32], strides = [1, 1]} : vector<8x96xf32> to vector<8x32xf32>
    %39 = arith.truncf %38 : vector<8x32xf32> to vector<8x32xbf16>
    %40 = vector.shape_cast %39 : vector<8x32xbf16> to vector<1x8x32xbf16>
    %41 = vector.extract_strided_slice %34 {offsets = [0, 0, 0], sizes = [1, 8, 8], strides = [1, 1, 1]} : vector<1x8x32xbf16> to vector<1x8x8xbf16>
    %42 = vector.extract_strided_slice %37 {offsets = [0, 0, 0], sizes = [1, 8, 8], strides = [1, 1, 1]} : vector<1x8x32xbf16> to vector<1x8x8xbf16>
    %43 = vector.extract_strided_slice %40 {offsets = [0, 0, 0], sizes = [1, 8, 8], strides = [1, 1, 1]} : vector<1x8x32xbf16> to vector<1x8x8xbf16>
    "tpu.trace_start"() <{level = 10 : i32, message = "bqd,bkd->bqk"}> : () -> ()
    %cst_16 = arith.constant dense<0.000000e+00> : vector<1x8x8xf32>
    %44 = tpu.matmul %41, %42, %cst_16 {dimension_numbers = #tpu.dot_dimension_numbers<[2], [2], [1], [1], [0, 0, 0, 1, 1, 1], [0], [0]>} : vector<1x8x8xbf16>, vector<1x8x8xbf16>, vector<1x8x8xf32> -> vector<1x8x8xf32>
    "tpu.trace_stop"() : () -> ()
    %cst_17 = arith.constant dense<0xFF800000> : vector<1x8xf32>
    %45 = vector.multi_reduction <maximumf>, %44, %cst_17 [2] : vector<1x8x8xf32> to vector<1x8xf32>
    %46 = vector.shape_cast %45 : vector<1x8xf32> to vector<1x8x1xf32>
    %47 = vector.broadcast %46 : vector<1x8x1xf32> to vector<1x8x8xf32>
    %48 = arith.subf %44, %47 : vector<1x8x8xf32>
    %49 = math.exp %48 : vector<1x8x8xf32>
    %cst_18 = arith.constant dense<0.000000e+00> : vector<1x8xf32>
    %50 = vector.multi_reduction <add>, %49, %cst_18 [2] : vector<1x8x8xf32> to vector<1x8xf32>
    %51 = vector.shape_cast %50 : vector<1x8xf32> to vector<1x8x1xf32>
    %52 = tpu.reciprocal %51 {approx = true} : vector<1x8x1xf32> -> vector<1x8x1xf32>
    %53 = arith.mulf %51, %52 : vector<1x8x1xf32>
    %cst_19 = arith.constant 2.000000e+00 : f32
    %54 = vector.broadcast %cst_19 : f32 to vector<1x8x1xf32>
    %55 = arith.subf %54, %53 : vector<1x8x1xf32>
    %56 = arith.mulf %52, %55 : vector<1x8x1xf32>
    %57 = vector.broadcast %56 : vector<1x8x1xf32> to vector<1x8x8xf32>
    %58 = arith.mulf %49, %57 : vector<1x8x8xf32>
    %59 = arith.truncf %58 : vector<1x8x8xf32> to vector<1x8x8xbf16>
    "tpu.trace_start"() <{level = 10 : i32, message = "bqk,bkd->bqd"}> : () -> ()
    %cst_20 = arith.constant dense<0.000000e+00> : vector<1x8x8xf32>
    %60 = tpu.matmul %59, %43, %cst_20 {dimension_numbers = #tpu.dot_dimension_numbers<[2], [1], [1], [2], [0, 0, 0, 1, 1, 2], [0], [0]>} : vector<1x8x8xbf16>, vector<1x8x8xbf16>, vector<1x8x8xf32> -> vector<1x8x8xf32>
    "tpu.trace_stop"() : () -> ()
    %c0_21 = arith.constant 0 : index
    %c0_22 = arith.constant 0 : index
    %c0_23 = arith.constant 0 : index
    %61 = vector.load %arg9[%c0_21, %c0_22, %c0_23] : memref<1x8x32xf32, #tpu.memory_space<vmem>>, vector<1x8x8xf32>
    tpu.vector_store %arg9[%c0_21, %c0_22, %c0_23], %60 {strides = array<i32>} : memref<1x8x32xf32, #tpu.memory_space<vmem>>, vector<1x8x8xf32>,
    %62 = vector.extract_strided_slice %34 {offsets = [0, 0, 8], sizes = [1, 8, 8], strides = [1, 1, 1]} : vector<1x8x32xbf16> to vector<1x8x8xbf16>
    %63 = vector.extract_strided_slice %37 {offsets = [0, 0, 8], sizes = [1, 8, 8], strides = [1, 1, 1]} : vector<1x8x32xbf16> to vector<1x8x8xbf16>
    %64 = vector.extract_strided_slice %40 {offsets = [0, 0, 8], sizes = [1, 8, 8], strides = [1, 1, 1]} : vector<1x8x32xbf16> to vector<1x8x8xbf16>
    "tpu.trace_start"() <{level = 10 : i32, message = "bqd,bkd->bqk"}> : () -> ()
    %cst_24 = arith.constant dense<0.000000e+00> : vector<1x8x8xf32>
    %65 = tpu.matmul %62, %63, %cst_24 {dimension_numbers = #tpu.dot_dimension_numbers<[2], [2], [1], [1], [0, 0, 0, 1, 1, 1], [0], [0]>} : vector<1x8x8xbf16>, vector<1x8x8xbf16>, vector<1x8x8xf32> -> vector<1x8x8xf32>
    "tpu.trace_stop"() : () -> ()
    %cst_25 = arith.constant dense<0xFF800000> : vector<1x8xf32>
    %66 = vector.multi_reduction <maximumf>, %65, %cst_25 [2] : vector<1x8x8xf32> to vector<1x8xf32>
    %67 = vector.shape_cast %66 : vector<1x8xf32> to vector<1x8x1xf32>
    %68 = vector.broadcast %67 : vector<1x8x1xf32> to vector<1x8x8xf32>
    %69 = arith.subf %65, %68 : vector<1x8x8xf32>
    %70 = math.exp %69 : vector<1x8x8xf32>
    %cst_26 = arith.constant dense<0.000000e+00> : vector<1x8xf32>
    %71 = vector.multi_reduction <add>, %70, %cst_26 [2] : vector<1x8x8xf32> to vector<1x8xf32>
    %72 = vector.shape_cast %71 : vector<1x8xf32> to vector<1x8x1xf32>
    %73 = tpu.reciprocal %72 {approx = true} : vector<1x8x1xf32> -> vector<1x8x1xf32>
    %74 = arith.mulf %72, %73 : vector<1x8x1xf32>
    %cst_27 = arith.constant 2.000000e+00 : f32
    %75 = vector.broadcast %cst_27 : f32 to vector<1x8x1xf32>
    %76 = arith.subf %75, %74 : vector<1x8x1xf32>
    %77 = arith.mulf %73, %76 : vector<1x8x1xf32>
    %78 = vector.broadcast %77 : vector<1x8x1xf32> to vector<1x8x8xf32>
    %79 = arith.mulf %70, %78 : vector<1x8x8xf32>
    %80 = arith.truncf %79 : vector<1x8x8xf32> to vector<1x8x8xbf16>
    "tpu.trace_start"() <{level = 10 : i32, message = "bqk,bkd->bqd"}> : () -> ()
    %cst_28 = arith.constant dense<0.000000e+00> : vector<1x8x8xf32>
    %81 = tpu.matmul %80, %64, %cst_28 {dimension_numbers = #tpu.dot_dimension_numbers<[2], [1], [1], [2], [0, 0, 0, 1, 1, 2], [0], [0]>} : vector<1x8x8xbf16>, vector<1x8x8xbf16>, vector<1x8x8xf32> -> vector<1x8x8xf32>
    "tpu.trace_stop"() : () -> ()
    %c0_29 = arith.constant 0 : index
    %c0_30 = arith.constant 0 : index
    %c8 = arith.constant 8 : index
    %82 = vector.load %arg9[%c0_29, %c0_30, %c8] : memref<1x8x32xf32, #tpu.memory_space<vmem>>, vector<1x8x8xf32>
    tpu.vector_store %arg9[%c0_29, %c0_30, %c8], %81 {strides = array<i32>} : memref<1x8x32xf32, #tpu.memory_space<vmem>>, vector<1x8x8xf32>,
    %83 = vector.extract_strided_slice %34 {offsets = [0, 0, 16], sizes = [1, 8, 8], strides = [1, 1, 1]} : vector<1x8x32xbf16> to vector<1x8x8xbf16>
    %84 = vector.extract_strided_slice %37 {offsets = [0, 0, 16], sizes = [1, 8, 8], strides = [1, 1, 1]} : vector<1x8x32xbf16> to vector<1x8x8xbf16>
    %85 = vector.extract_strided_slice %40 {offsets = [0, 0, 16], sizes = [1, 8, 8], strides = [1, 1, 1]} : vector<1x8x32xbf16> to vector<1x8x8xbf16>
    "tpu.trace_start"() <{level = 10 : i32, message = "bqd,bkd->bqk"}> : () -> ()
    %cst_31 = arith.constant dense<0.000000e+00> : vector<1x8x8xf32>
    %86 = tpu.matmul %83, %84, %cst_31 {dimension_numbers = #tpu.dot_dimension_numbers<[2], [2], [1], [1], [0, 0, 0, 1, 1, 1], [0], [0]>} : vector<1x8x8xbf16>, vector<1x8x8xbf16>, vector<1x8x8xf32> -> vector<1x8x8xf32>
    "tpu.trace_stop"() : () -> ()
    %cst_32 = arith.constant dense<0xFF800000> : vector<1x8xf32>
    %87 = vector.multi_reduction <maximumf>, %86, %cst_32 [2] : vector<1x8x8xf32> to vector<1x8xf32>
    %88 = vector.shape_cast %87 : vector<1x8xf32> to vector<1x8x1xf32>
    %89 = vector.broadcast %88 : vector<1x8x1xf32> to vector<1x8x8xf32>
    %90 = arith.subf %86, %89 : vector<1x8x8xf32>
    %91 = math.exp %90 : vector<1x8x8xf32>
    %cst_33 = arith.constant dense<0.000000e+00> : vector<1x8xf32>
    %92 = vector.multi_reduction <add>, %91, %cst_33 [2] : vector<1x8x8xf32> to vector<1x8xf32>
    %93 = vector.shape_cast %92 : vector<1x8xf32> to vector<1x8x1xf32>
    %94 = tpu.reciprocal %93 {approx = true} : vector<1x8x1xf32> -> vector<1x8x1xf32>
    %95 = arith.mulf %93, %94 : vector<1x8x1xf32>
    %cst_34 = arith.constant 2.000000e+00 : f32
    %96 = vector.broadcast %cst_34 : f32 to vector<1x8x1xf32>
    %97 = arith.subf %96, %95 : vector<1x8x1xf32>
    %98 = arith.mulf %94, %97 : vector<1x8x1xf32>
    %99 = vector.broadcast %98 : vector<1x8x1xf32> to vector<1x8x8xf32>
    %100 = arith.mulf %91, %99 : vector<1x8x8xf32>
    %101 = arith.truncf %100 : vector<1x8x8xf32> to vector<1x8x8xbf16>
    "tpu.trace_start"() <{level = 10 : i32, message = "bqk,bkd->bqd"}> : () -> ()
    %cst_35 = arith.constant dense<0.000000e+00> : vector<1x8x8xf32>
    %102 = tpu.matmul %101, %85, %cst_35 {dimension_numbers = #tpu.dot_dimension_numbers<[2], [1], [1], [2], [0, 0, 0, 1, 1, 2], [0], [0]>} : vector<1x8x8xbf16>, vector<1x8x8xbf16>, vector<1x8x8xf32> -> vector<1x8x8xf32>
    "tpu.trace_stop"() : () -> ()
    %c0_36 = arith.constant 0 : index
    %c0_37 = arith.constant 0 : index
    %c16 = arith.constant 16 : index
    %103 = vector.load %arg9[%c0_36, %c0_37, %c16] : memref<1x8x32xf32, #tpu.memory_space<vmem>>, vector<1x8x8xf32>
    tpu.vector_store %arg9[%c0_36, %c0_37, %c16], %102 {strides = array<i32>} : memref<1x8x32xf32, #tpu.memory_space<vmem>>, vector<1x8x8xf32>,
    %104 = vector.extract_strided_slice %34 {offsets = [0, 0, 24], sizes = [1, 8, 8], strides = [1, 1, 1]} : vector<1x8x32xbf16> to vector<1x8x8xbf16>
    %105 = vector.extract_strided_slice %37 {offsets = [0, 0, 24], sizes = [1, 8, 8], strides = [1, 1, 1]} : vector<1x8x32xbf16> to vector<1x8x8xbf16>
    %106 = vector.extract_strided_slice %40 {offsets = [0, 0, 24], sizes = [1, 8, 8], strides = [1, 1, 1]} : vector<1x8x32xbf16> to vector<1x8x8xbf16>
    "tpu.trace_start"() <{level = 10 : i32, message = "bqd,bkd->bqk"}> : () -> ()
    %cst_38 = arith.constant dense<0.000000e+00> : vector<1x8x8xf32>
    %107 = tpu.matmul %104, %105, %cst_38 {dimension_numbers = #tpu.dot_dimension_numbers<[2], [2], [1], [1], [0, 0, 0, 1, 1, 1], [0], [0]>} : vector<1x8x8xbf16>, vector<1x8x8xbf16>, vector<1x8x8xf32> -> vector<1x8x8xf32>
    "tpu.trace_stop"() : () -> ()
    %cst_39 = arith.constant dense<0xFF800000> : vector<1x8xf32>
    %108 = vector.multi_reduction <maximumf>, %107, %cst_39 [2] : vector<1x8x8xf32> to vector<1x8xf32>
    %109 = vector.shape_cast %108 : vector<1x8xf32> to vector<1x8x1xf32>
    %110 = vector.broadcast %109 : vector<1x8x1xf32> to vector<1x8x8xf32>
    %111 = arith.subf %107, %110 : vector<1x8x8xf32>
    %112 = math.exp %111 : vector<1x8x8xf32>
    %cst_40 = arith.constant dense<0.000000e+00> : vector<1x8xf32>
    %113 = vector.multi_reduction <add>, %112, %cst_40 [2] : vector<1x8x8xf32> to vector<1x8xf32>
    %114 = vector.shape_cast %113 : vector<1x8xf32> to vector<1x8x1xf32>
    %115 = tpu.reciprocal %114 {approx = true} : vector<1x8x1xf32> -> vector<1x8x1xf32>
    %116 = arith.mulf %114, %115 : vector<1x8x1xf32>
    %cst_41 = arith.constant 2.000000e+00 : f32
    %117 = vector.broadcast %cst_41 : f32 to vector<1x8x1xf32>
    %118 = arith.subf %117, %116 : vector<1x8x1xf32>
    %119 = arith.mulf %115, %118 : vector<1x8x1xf32>
    %120 = vector.broadcast %119 : vector<1x8x1xf32> to vector<1x8x8xf32>
    %121 = arith.mulf %112, %120 : vector<1x8x8xf32>
    %122 = arith.truncf %121 : vector<1x8x8xf32> to vector<1x8x8xbf16>
    "tpu.trace_start"() <{level = 10 : i32, message = "bqk,bkd->bqd"}> : () -> ()
    %cst_42 = arith.constant dense<0.000000e+00> : vector<1x8x8xf32>
    %123 = tpu.matmul %122, %106, %cst_42 {dimension_numbers = #tpu.dot_dimension_numbers<[2], [1], [1], [2], [0, 0, 0, 1, 1, 2], [0], [0]>} : vector<1x8x8xbf16>, vector<1x8x8xbf16>, vector<1x8x8xf32> -> vector<1x8x8xf32>
    "tpu.trace_stop"() : () -> ()
    %c0_43 = arith.constant 0 : index
    %c0_44 = arith.constant 0 : index
    %c24 = arith.constant 24 : index
    %124 = vector.load %arg9[%c0_43, %c0_44, %c24] : memref<1x8x32xf32, #tpu.memory_space<vmem>>, vector<1x8x8xf32>
    tpu.vector_store %arg9[%c0_43, %c0_44, %c24], %123 {strides = array<i32>} : memref<1x8x32xf32, #tpu.memory_space<vmem>>, vector<1x8x8xf32>,
    %c0_45 = arith.constant 0 : index
    %c0_46 = arith.constant 0 : index
    %c0_47 = arith.constant 0 : index
    %125 = vector.load %arg9[%c0_45, %c0_46, %c0_47] : memref<1x8x32xf32, #tpu.memory_space<vmem>>, vector<1x8x32xf32>
    %126 = vector.shape_cast %125 : vector<1x8x32xf32> to vector<8x32xf32>
    %127 = arith.truncf %126 : vector<8x32xf32> to vector<8x32xbf16>
    %c0_48 = arith.constant 0 : index
    %c0_49 = arith.constant 0 : index
    %128 = vector.load %arg6[%c0_48, %c0_49] : memref<32x32xbf16, #tpu.memory_space<vmem>>, vector<32x32xbf16>
    %cst_50 = arith.constant dense<0.000000e+00> : vector<8x32xf32>
    %129 = tpu.matmul %127, %128, %cst_50 {dimension_numbers = #tpu.dot_dimension_numbers<[1], [0], [0], [1], [0, 0, 1, 1], [], []>} : vector<8x32xbf16>, vector<32x32xbf16>, vector<8x32xf32> -> vector<8x32xf32>
    %c0_51 = arith.constant 0 : index
    %c0_52 = arith.constant 0 : index
    %130 = vector.load %arg7[%c0_51, %c0_52] : memref<1x32xf32, #tpu.memory_space<vmem>>, vector<1x32xf32>
    %131 = vector.broadcast %130 : vector<1x32xf32> to vector<8x32xf32>
    %132 = arith.addf %129, %131 : vector<8x32xf32>
    %133 = arith.addf %1, %132 : vector<8x32xf32>
    %134 = vector.shape_cast %133 : vector<8x32xf32> to vector<1x8x32xf32>
    %c0_53 = arith.constant 0 : index
    %c0_54 = arith.constant 0 : index
    %c0_55 = arith.constant 0 : index
    %135 = vector.load %arg8[%c0_53, %c0_54, %c0_55] : memref<1x8x32xf32, #tpu.memory_space<vmem>>, vector<1x8x32xf32>
    tpu.vector_store %arg8[%c0_53, %c0_54, %c0_55], %134 {strides = array<i32>} : memref<1x8x32xf32, #tpu.memory_space<vmem>>, vector<1x8x32xf32>,
    return
  }
  func.func @transform_0(%arg0: i32) -> (i32, i32, i32) {
    %c0_i32 = arith.constant 0 : i32
    %c0_i32_0 = arith.constant 0 : i32
    %c0_i32_1 = arith.constant 0 : i32
    return %arg0, %c0_i32, %c0_i32_0 : i32, i32, i32
  }
  func.func @transform_1(%arg0: i32) -> (i32, i32) {
    %c0_i32 = arith.constant 0 : i32
    %c0_i32_0 = arith.constant 0 : i32
    %c0_i32_1 = arith.constant 0 : i32
    return %c0_i32, %c0_i32_0 : i32, i32
  }
  func.func @transform_2(%arg0: i32) -> (i32, i32) {
    %c0_i32 = arith.constant 0 : i32
    %c0_i32_0 = arith.constant 0 : i32
    %c0_i32_1 = arith.constant 0 : i32
    return %c0_i32, %c0_i32_0 : i32, i32
  }
  func.func @transform_3(%arg0: i32) -> (i32, i32) {
    %c0_i32 = arith.constant 0 : i32
    %c0_i32_0 = arith.constant 0 : i32
    %c0_i32_1 = arith.constant 0 : i32
    return %c0_i32, %c0_i32_0 : i32, i32
  }
  func.func @transform_4(%arg0: i32) -> (i32, i32) {
    %c0_i32 = arith.constant 0 : i32
    %c0_i32_0 = arith.constant 0 : i32
    %c0_i32_1 = arith.constant 0 : i32
    return %c0_i32, %c0_i32_0 : i32, i32
  }
  func.func @transform_5(%arg0: i32) -> (i32, i32) {
    %c0_i32 = arith.constant 0 : i32
    %c0_i32_0 = arith.constant 0 : i32
    %c0_i32_1 = arith.constant 0 : i32
    return %c0_i32, %c0_i32_0 : i32, i32
  }
  func.func @transform_6(%arg0: i32) -> (i32, i32) {
    %c0_i32 = arith.constant 0 : i32
    %c0_i32_0 = arith.constant 0 : i32
    %c0_i32_1 = arith.constant 0 : i32
    return %c0_i32, %c0_i32_0 : i32, i32
  }
  func.func @transform_7(%arg0: i32) -> (i32, i32, i32) {
    %c0_i32 = arith.constant 0 : i32
    %c0_i32_0 = arith.constant 0 : i32
    %c0_i32_1 = arith.constant 0 : i32
    return %arg0, %c0_i32, %c0_i32_0 : i32, i32, i32
  }
}

</mosaic_0001>

<llo_original>
// kernel: mhsa_forward.1
$region0: #{mhsa_forward.1}
  #allocation0 [shape = 'u32[]', space=smem, size = 0x4, offset = 0x4, fixed_abs, tag = 'smem constant byte address 0x4 - core index']
  #allocation1 [shape = 'u32[144,128]{1,0:T(1,128)}', space=vmem, size = 0x12000, scoped, tag = 'internal scratch']
  #allocation2 [shape = 'f32[1,8,32]{2,1,0:T(8,128)}', space=vmem, size = 0x1000, scoped, tag = 'scratch operand']
  %s0 = inlined_call_operand.hbm [shape: f32[2,8,32], index: 0, kind: input, shape index: {}]
  %s1 = inlined_call_operand.vmem [shape: f32[1,32], index: 1, kind: input, shape index: {}]
  %s2 = inlined_call_operand.vmem [shape: f32[1,32], index: 2, kind: input, shape index: {}]
  %s3 = inlined_call_operand.vmem [shape: bf16[32,96], index: 3, kind: input, shape index: {}]
  %s4 = inlined_call_operand.vmem [shape: f32[1,96], index: 4, kind: input, shape index: {}]
  %s5 = inlined_call_operand.hbm [shape: bf16[32,32], index: 5, kind: input, shape index: {}]
  %s6 = inlined_call_operand.hbm [shape: f32[1,32], index: 6, kind: input, shape index: {}]
  %s7 = inlined_call_operand.hbm [shape: f32[2,8,32], index: 7, kind: output, shape index: {}]
  %s8 = sld [smem:[#allocation0]]
  $region73: #{mhsa_forward.1} parent=0
    _
  %s10 = ssub.s32 1, %s8
  %s11 = scalar_select 0, %s10, %s8
  $region1: #{mhsa_forward.1} parent=0
    #allocation3 [shape = 'u8[8192]{0}', space=vmem, size = 0x2000, scoped, tag = 'input window, operand 0']
    #allocation4 [shape = 's32[2]{0}', space=sflag, size = 0x8, scoped, tag = 'scoped memory for mhsa_forward.1']
    #allocation5 [shape = 's32[2]{0}', space=sflag, size = 0x8, scoped, tag = 'scoped memory for mhsa_forward.1']
    #allocation6 [shape = 'u8[8192]{0}', space=vmem, size = 0x2000, scoped, tag = 'input window, operand 5, single buffered']
    #allocation7 [shape = 's32[1]{0}', space=sflag, size = 0x4, scoped, tag = 'scoped memory for mhsa_forward.1']
    #allocation8 [shape = 'u8[512]{0}', space=vmem, size = 0x400, scoped, tag = 'input window, operand 6, single buffered']
    #allocation9 [shape = 'u8[8192]{0}', space=vmem, size = 0x2000, scoped, tag = 'output window, operand 0']
    %12 = vsyncpa [#allocation4], 0
    %s13 = scalar_lea.sflag [#allocation4], 1
    %14 = vsyncpa %s13, 0
    %15 = vsyncpa [#allocation7], 0
    %16 = vsyncpa [#allocation5], 0
    %s17 = scalar_lea.sflag [#allocation5], 1
    %18 = vsyncpa %s17, 0
    loop: start=0, step=1, limit=4
    $region2: #{mhsa_forward.1} parent=1 // loop_pre_header
      _
    $region3: #{mhsa_forward.1} parent=1 // loop_header
      %s20 = sphi 0, %s24
      %p21 = scmp.ge.s32.totalorder %s20, 4
      %s30 = sphi 0, %s32
      %s33 = sphi 0, %s30
      %s34 = sphi 0, %s33
      %s50 = sphi 0, %s34
      %s54 = sphi 0, %s54
      %s56 = sphi 0, %s54
      %s57 = sphi 0, %s56
      %s71 = sphi 0, %s57
      %s75 = sphi 0, %s75
      %s77 = sphi 0, %s75
      %s78 = sphi 0, %s77
      %s92 = sphi 0, %s78
      %s96 = sphi 0, %s96
      %s98 = sphi 0, %s96
      %s99 = sphi 0, %s98
      %s113 = sphi 0, %s99
      %s117 = sphi 0, %s117
      %s119 = sphi 0, %s117
      %s120 = sphi 0, %s119
      %s134 = sphi 0, %s120
      %s138 = sphi 0, %s138
      %s140 = sphi 0, %s138
      %s141 = sphi 0, %s140
      %s155 = sphi 0, %s141
      %s159 = sphi 0, %s159
      %s161 = sphi 0, %s159
      %s162 = sphi 0, %s161
      %s176 = sphi 0, %s162
      %s182 = sphi 0, %s184
      %s185 = sphi 0, %s182
      %s186 = sphi 0, %s185
      %s202 = sphi 0, %s186
    $region4: #{mhsa_forward.1} parent=1 // loop_header_branch
      %23 = sbr.rel (%p21) target = $region8
    $region5: #{mhsa_forward.1} parent=1 // loop_body
      %s25 = ssub.s32 %s20, 1
      %s26 = ssub.s32 %s20, 2
      %s27 = sadd.s32 %s20, 1
      %s28 = ssub.s32 %s20, %s27
      %p29 = scmp.eq.s32.totalorder %s28, 0
      %s31 = sadd.s32 %s30, 1
      %s32 = scalar_select %p29, %s30, %s31
      %p35 = pneg %p29
      %p36 = scmp.eq.s32.totalorder %s20, 1
      %p37 = por %p35, %p36
      %p38 = scmp.ne.s32.totalorder %s30, %s33
      %p39 = scmp.eq.s32.totalorder %s20, 0
      %p40 = por %p38, %p39
      %p41 = scmp.ne.s32.totalorder %s30, %s33
      %p42 = scmp.eq.s32.totalorder %s25, 1
      %p43 = por %p41, %p42
      %p44 = scmp.ne.s32.totalorder %s33, %s34
      %p45 = scmp.eq.s32.totalorder %s25, 0
      %p46 = por %p44, %p45
      %p47 = scmp.ne.s32.totalorder %s33, %s34
      %p48 = scmp.eq.s32.totalorder %s26, 1
      %p49 = por %p47, %p48
      %p51 = scmp.ne.s32.totalorder %s34, %s50
      %p52 = scmp.eq.s32.totalorder %s26, 0
      %p53 = por %p51, %p52
      %s55 = sadd.s32 %s54, 1
      %p58 = scmp.eq.s32.totalorder %s20, 1
      %p59 = scmp.ne.s32.totalorder %s54, %s56
      %p60 = scmp.eq.s32.totalorder %s20, 0
      %p61 = por %p59, %p60
      %p62 = scmp.ne.s32.totalorder %s54, %s56
      %p63 = scmp.eq.s32.totalorder %s25, 1
      %p64 = por %p62, %p63
      %p65 = scmp.ne.s32.totalorder %s56, %s57
      %p66 = scmp.eq.s32.totalorder %s25, 0
      %p67 = por %p65, %p66
      %p68 = scmp.ne.s32.totalorder %s56, %s57
      %p69 = scmp.eq.s32.totalorder %s26, 1
      %p70 = por %p68, %p69
      %p72 = scmp.ne.s32.totalorder %s57, %s71
      %p73 = scmp.eq.s32.totalorder %s26, 0
      %p74 = por %p72, %p73
      %s76 = sadd.s32 %s75, 1
      %p79 = scmp.eq.s32.totalorder %s20, 1
      %p80 = scmp.ne.s32.totalorder %s75, %s77
      %p81 = scmp.eq.s32.totalorder %s20, 0
      %p82 = por %p80, %p81
      %p83 = scmp.ne.s32.totalorder %s75, %s77
      %p84 = scmp.eq.s32.totalorder %s25, 1
      %p85 = por %p83, %p84
      %p86 = scmp.ne.s32.totalorder %s77, %s78
      %p87 = scmp.eq.s32.totalorder %s25, 0
      %p88 = por %p86, %p87
      %p89 = scmp.ne.s32.totalorder %s77, %s78
      %p90 = scmp.eq.s32.totalorder %s26, 1
      %p91 = por %p89, %p90
      %p93 = scmp.ne.s32.totalorder %s78, %s92
      %p94 = scmp.eq.s32.totalorder %s26, 0
      %p95 = por %p93, %p94
      %s97 = sadd.s32 %s96, 1
      %p100 = scmp.eq.s32.totalorder %s20, 1
      %p101 = scmp.ne.s32.totalorder %s96, %s98
      %p102 = scmp.eq.s32.totalorder %s20, 0
      %p103 = por %p101, %p102
      %p104 = scmp.ne.s32.totalorder %s96, %s98
      %p105 = scmp.eq.s32.totalorder %s25, 1
      %p106 = por %p104, %p105
      %p107 = scmp.ne.s32.totalorder %s98, %s99
      %p108 = scmp.eq.s32.totalorder %s25, 0
      %p109 = por %p107, %p108
      %p110 = scmp.ne.s32.totalorder %s98, %s99
      %p111 = scmp.eq.s32.totalorder %s26, 1
      %p112 = por %p110, %p111
      %p114 = scmp.ne.s32.totalorder %s99, %s113
      %p115 = scmp.eq.s32.totalorder %s26, 0
      %p116 = por %p114, %p115
      %s118 = sadd.s32 %s117, 1
      %p121 = scmp.eq.s32.totalorder %s20, 1
      %p122 = scmp.ne.s32.totalorder %s117, %s119
      %p123 = scmp.eq.s32.totalorder %s20, 0
      %p124 = por %p122, %p123
      %p125 = scmp.ne.s32.totalorder %s117, %s119
      %p126 = scmp.eq.s32.totalorder %s25, 1
      %p127 = por %p125, %p126
      %p128 = scmp.ne.s32.totalorder %s119, %s120
      %p129 = scmp.eq.s32.totalorder %s25, 0
      %p130 = por %p128, %p129
      %p131 = scmp.ne.s32.totalorder %s119, %s120
      %p132 = scmp.eq.s32.totalorder %s26, 1
      %p133 = por %p131, %p132
      %p135 = scmp.ne.s32.totalorder %s120, %s134
      %p136 = scmp.eq.s32.totalorder %s26, 0
      %p137 = por %p135, %p136
      %s139 = sadd.s32 %s138, 1
      %p142 = scmp.eq.s32.totalorder %s20, 1
      %p143 = scmp.ne.s32.totalorder %s138, %s140
      %p144 = scmp.eq.s32.totalorder %s20, 0
      %p145 = por %p143, %p144
      %p146 = scmp.ne.s32.totalorder %s138, %s140
      %p147 = scmp.eq.s32.totalorder %s25, 1
      %p148 = por %p146, %p147
      %p149 = scmp.ne.s32.totalorder %s140, %s141
      %p150 = scmp.eq.s32.totalorder %s25, 0
      %p151 = por %p149, %p150
      %p152 = scmp.ne.s32.totalorder %s140, %s141
      %p153 = scmp.eq.s32.totalorder %s26, 1
      %p154 = por %p152, %p153
      %p156 = scmp.ne.s32.totalorder %s141, %s155
      %p157 = scmp.eq.s32.totalorder %s26, 0
      %p158 = por %p156, %p157
      %s160 = sadd.s32 %s159, 1
      %p163 = scmp.eq.s32.totalorder %s20, 1
      %p164 = scmp.ne.s32.totalorder %s159, %s161
      %p165 = scmp.eq.s32.totalorder %s20, 0
      %p166 = por %p164, %p165
      %p167 = scmp.ne.s32.totalorder %s159, %s161
      %p168 = scmp.eq.s32.totalorder %s25, 1
      %p169 = por %p167, %p168
      %p170 = scmp.ne.s32.totalorder %s161, %s162
      %p171 = scmp.eq.s32.totalorder %s25, 0
      %p172 = por %p170, %p171
      %p173 = scmp.ne.s32.totalorder %s161, %s162
      %p174 = scmp.eq.s32.totalorder %s26, 1
      %p175 = por %p173, %p174
      %p177 = scmp.ne.s32.totalorder %s162, %s176
      %p178 = scmp.eq.s32.totalorder %s26, 0
      %p179 = por %p177, %p178
      %s180 = ssub.s32 %s20, %s27
      %p181 = scmp.eq.s32.totalorder %s180, 0
      %s183 = sadd.s32 %s182, 1
      %s184 = scalar_select %p181, %s182, %s183
      %p187 = pneg %p181
      %p188 = scmp.eq.s32.totalorder %s20, 1
      %p189 = por %p187, %p188
      %p190 = scmp.ne.s32.totalorder %s182, %s185
      %p191 = scmp.eq.s32.totalorder %s20, 0
      %p192 = por %p190, %p191
      %p193 = scmp.ne.s32.totalorder %s182, %s185
      %p194 = scmp.eq.s32.totalorder %s25, 1
      %p195 = por %p193, %p194
      %p196 = scmp.ne.s32.totalorder %s185, %s186
      %p197 = scmp.eq.s32.totalorder %s25, 0
      %p198 = por %p196, %p197
      %p199 = scmp.ne.s32.totalorder %s185, %s186
      %p200 = scmp.eq.s32.totalorder %s26, 1
      %p201 = por %p199, %p200
      %p203 = scmp.ne.s32.totalorder %s186, %s202
      %p204 = scmp.eq.s32.totalorder %s26, 0
      %p205 = por %p203, %p204
      %p206 = scmp.le.s32.totalorder 1, %s20
      %p207 = scmp.lt.s32.totalorder %s20, 3
      %p208 = pnand %p206, %p207
      %p209 = pneg %p208
      // Predicated region
      $region9: #{mhsa_forward.1} parent=5 // pred_check
        _
      $region10: #{mhsa_forward.1} parent=5 // pred_check_branch
        %211 = sbr.rel (%p208) target = $region12
      $region11: #{mhsa_forward.1} parent=5 // pred_region
        %s212 = ssub.s32 %s20, 1
        // Predicated region
        $region13: #{mhsa_forward.1} parent=11 // pred_check
          %p213 = pneg %p67
        $region14: #{mhsa_forward.1} parent=11 // pred_check_branch
          %215 = sbr.rel (%p213) target = $region16
        $region15: #{mhsa_forward.1} parent=11 // pred_region
          _
        $region16: #{mhsa_forward.1} parent=11 // pred_fallthru
          _
        // Predicated region
        $region17: #{mhsa_forward.1} parent=11 // pred_check
          %p216 = pneg %p88
        $region18: #{mhsa_forward.1} parent=11 // pred_check_branch
          %218 = sbr.rel (%p216) target = $region20
        $region19: #{mhsa_forward.1} parent=11 // pred_region
          _
        $region20: #{mhsa_forward.1} parent=11 // pred_fallthru
          _
        // Predicated region
        $region21: #{mhsa_forward.1} parent=11 // pred_check
          %p219 = pneg %p109
        $region22: #{mhsa_forward.1} parent=11 // pred_check_branch
          %221 = sbr.rel (%p219) target = $region24
        $region23: #{mhsa_forward.1} parent=11 // pred_region
          _
        $region24: #{mhsa_forward.1} parent=11 // pred_fallthru
          _
        // Predicated region
        $region25: #{mhsa_forward.1} parent=11 // pred_check
          %p222 = pneg %p130
        $region26: #{mhsa_forward.1} parent=11 // pred_check_branch
          %224 = sbr.rel (%p222) target = $region28
        $region27: #{mhsa_forward.1} parent=11 // pred_region
          _
        $region28: #{mhsa_forward.1} parent=11 // pred_fallthru
          _
        // Predicated region
        $region29: #{mhsa_forward.1} parent=11 // pred_check
          %p225 = pneg %p151
        $region30: #{mhsa_forward.1} parent=11 // pred_check_branch
          %227 = sbr.rel (%p225) target = $region32
        $region31: #{mhsa_forward.1} parent=11 // pred_region
          %s229 = ssub.s32 256, 256
          %230 = vsyncadd [#allocation7], %s229
          %s231 = sshll.u32 [#allocation6], 4
          %s232 = int_to_ptr.vmem [resolvable:$true] %s231
          %237 = dma.hbm_to_vmem [thread:$0]  %s5, 256, %s232, [#allocation7], 64, 64, 4
        $region32: #{mhsa_forward.1} parent=11 // pred_fallthru
          _
        // Predicated region
        $region33: #{mhsa_forward.1} parent=11 // pred_check
          %p238 = pneg %p172
        $region34: #{mhsa_forward.1} parent=11 // pred_check_branch
          %240 = sbr.rel (%p238) target = $region36
        $region35: #{mhsa_forward.1} parent=11 // pred_region
          %s242 = ssub.s32 16, 16
          %243 = vsyncadd [#allocation7], %s242
          %s245 = sshll.u32 [#allocation8], 4
          %s246 = int_to_ptr.vmem [resolvable:$true] %s245
          %248 = dma.hbm_to_vmem [thread:$0]  %s6, 16, %s246, [#allocation7]
        $region36: #{mhsa_forward.1} parent=11 // pred_fallthru
          _
      $region12: #{mhsa_forward.1} parent=5 // pred_fallthru
        _
      %p249 = scmp.lt.s32.totalorder %s20, 2
      // Predicated region
      $region37: #{mhsa_forward.1} parent=5 // pred_check
        %p250 = pneg %p249
      $region38: #{mhsa_forward.1} parent=5 // pred_check_branch
        %252 = sbr.rel (%p250) target = $region40
      $region39: #{mhsa_forward.1} parent=5 // pred_region
        // Predicated region
        $region41: #{mhsa_forward.1} parent=39 // pred_check
          %p253 = pneg %p40
        $region42: #{mhsa_forward.1} parent=39 // pred_check_branch
          %255 = sbr.rel (%p253) target = $region44
        $region43: #{mhsa_forward.1} parent=39 // pred_region
          %s256 = sand.u32 %s30, 1
          %s257 = scalar_lea.sflag [#allocation4], %s256
          %s258 = sand.u32 %s30, 1
          %s259 = smul.addr %s258, 8
          %s260 = scalar_lea.vmem [#allocation3], %s259
          %s262 = ssub.s32 128, 128
          %263 = vsyncadd %s257, %s262
          %s264 = smul.addr %s20, 128
          %s265 = scalar_lea.hbm %s0, %s264
          %s267 = sshll.u32 %s260, 4
          %s268 = int_to_ptr.vmem [resolvable:$true] %s267
          %270 = dma.hbm_to_vmem [thread:$0]  %s265, 128, %s268, %s257
        $region44: #{mhsa_forward.1} parent=39 // pred_fallthru
          _
      $region40: #{mhsa_forward.1} parent=5 // pred_fallthru
        _
      %p271 = scmp.le.s32.totalorder 1, %s20
      %p272 = scmp.lt.s32.totalorder %s20, 3
      %p273 = pnand %p271, %p272
      %p274 = pneg %p273
      // Predicated region
      $region45: #{mhsa_forward.1} parent=5 // pred_check
        _
      $region46: #{mhsa_forward.1} parent=5 // pred_check_branch
        %276 = sbr.rel (%p273) target = $region48
      $region47: #{mhsa_forward.1} parent=5 // pred_region
        %s277 = ssub.s32 %s20, 1
        %s278 = sand.u32 %s33, 1
        %s279 = scalar_lea.sflag [#allocation4], %s278
        %s280 = sand.u32 %s33, 1
        %s281 = smul.addr %s280, 8
        %s282 = scalar_lea.vmem [#allocation3], %s281
        // Predicated region
        $region49: #{mhsa_forward.1} parent=47 // pred_check
          %p283 = pneg %p46
        $region50: #{mhsa_forward.1} parent=47 // pred_check_branch
          %285 = sbr.rel (%p283) target = $region52
        $region51: #{mhsa_forward.1} parent=47 // pred_region
          %286 = dma.done %s279, 128
        $region52: #{mhsa_forward.1} parent=47 // pred_fallthru
          _
        // Predicated region
        $region53: #{mhsa_forward.1} parent=47 // pred_check
          %p287 = pneg %p151
        $region54: #{mhsa_forward.1} parent=47 // pred_check_branch
          %289 = sbr.rel (%p287) target = $region56
        $region55: #{mhsa_forward.1} parent=47 // pred_region
          %290 = dma.done [#allocation7], 256
        $region56: #{mhsa_forward.1} parent=47 // pred_fallthru
          _
        // Predicated region
        $region57: #{mhsa_forward.1} parent=47 // pred_check
          %p291 = pneg %p172
        $region58: #{mhsa_forward.1} parent=47 // pred_check_branch
          %293 = sbr.rel (%p291) target = $region60
        $region59: #{mhsa_forward.1} parent=47 // pred_region
          %294 = dma.done [#allocation7], 16
        $region60: #{mhsa_forward.1} parent=47 // pred_fallthru
          _
        %s295 = sand.u32 %s33, 1
        %s296 = scalar_lea.sflag [#allocation4], %s295
        %s297 = sand.u32 %s33, 1
        %s298 = smul.addr %s297, 8
        %s299 = scalar_lea.vmem [#allocation3], %s298
        %p300 = pneg %p46
        %p301 = pneg %p43
        %p302 = pneg %p67
        %p303 = pneg %p64
        %p304 = pneg %p88
        %p305 = pneg %p85
        %p306 = pneg %p109
        %p307 = pneg %p106
        %p308 = pneg %p130
        %p309 = pneg %p127
        %p310 = pneg %p151
        %p311 = pneg %p148
        %p312 = pneg %p172
        %p313 = pneg %p169
        %p314 = pneg %p198
        %p315 = pneg %p195
        %s316 = sand.u32 %s185, 1
        %s317 = scalar_lea.sflag [#allocation5], %s316
        %s318 = sand.u32 %s185, 1
        %s319 = smul.addr %s318, 8
        %s320 = scalar_lea.vmem [#allocation9], %s319
        %v322 = vld [vmem:[%s282] sm:$0xff]
        %vm323 = vcmask 261120
        %v324 = vsel %vm323, %v322, 0.0
        %325 = vadd.xlane.f32.xlu0 %v324
        %v326 = vpop.xlane.xlu0 %325
        %v327 = vrcp.pop 32.0
        %v328 = vmul.f32 %v326, %v327
        %v329 = vsub.f32 %v322, %v328
        %v330 = vmul.f32 %v329, %v329
        %v331 = vsel %vm323, %v330, 0.0
        %332 = vadd.xlane.f32.xlu0 %v331
        %v333 = vpop.xlane.xlu0 %332
        %v334 = vmul.f32 %v333, %v327
        %v335 = vadd.f32 %v334, 1e-05
        %v336 = vrsqrt.pop %v335
        %v337 = vmul.f32 %v329, %v336
        %v338 = vld [vmem:[%s1] sm:$0x1]
        %v340 = vlaneseq
        %v341 = vshrl.u32 %v340, 7
        %v342 = vsub.s32 0, %v341
        %v343 = vrot.slane %v338, %v342
        %v345 = vmul.f32 %v337, %v343
        %v346 = vld [vmem:[%s2] sm:$0x1]
        %v348 = vlaneseq
        %v349 = vshrl.u32 %v348, 7
        %v350 = vsub.s32 0, %v349
        %v351 = vrot.slane %v346, %v350
        %v353 = vadd.f32 %v345, %v351
        %v354 = vpack.c.bf16 %v353, %v353
        %v355 = vld [vmem:[%s3] sm:$0xf]
        %v356 = vld [vmem:[%s3 + $0x4] sm:$0xf]
        %v357 = vld [vmem:[%s3 + $0x8] sm:$0xf]
        %v358 = vld [vmem:[%s3 + $0xc] sm:$0xf]
        %v359 = vld [vmem:[%s4] sm:$0x1]
        %v361 = vlaneseq
        %v362 = vshrl.u32 %v361, 7
        %v363 = vsub.s32 0, %v362
        %v364 = vrot.slane %v359, %v363
        %v370 = vunpack.c.l.b16 %v355
        %v371 = vunpack.c.l.b16 %v356
        %v372 = vunpack.c.l.b16 %v357
        %v373 = vunpack.c.l.b16 %v358
        %v374 = vpack.c.b16 %v371, %v370
        %v375 = vpack.c.b16 %v373, %v372
        %v379 = vsel %vm323, %v354, 0
        %381 = vmatprep.subr.bf16.mxu0 0
        %382 = vmatpush1.bf16.msra.mxu0 %v374
        %383 = vmatprep.subr.bf16.mxu0 0
        %384 = vmatpush1.bf16.msra.mxu0 %v375
        %385 = vmatprep.subr.bf16.mxu0 0
        %386 = vmatpush1.bf16.msra.mxu0 0
        %387 = vmatprep.subr.bf16.mxu0 0
        %388 = vmatpush1.bf16.msra.mxu0 0
        %389 = vmatprep.subr.bf16.mxu0 0
        %390 = vmatpush1.bf16.msra.mxu0 0
        %391 = vmatprep.subr.bf16.mxu0 0
        %392 = vmatpush1.bf16.msra.mxu0 0
        %393 = vmatprep.subr.bf16.mxu0 0
        %394 = vmatpush1.bf16.msra.mxu0 0
        %395 = vmatprep.subr.bf16.mxu0 0
        %396 = vmatpush1.bf16.msra.mxu0 0
        %397 = vmatprep.subr.bf16.mxu0 0
        %398 = vmatpush1.bf16.msra.mxu0 0
        %399 = vmatprep.subr.bf16.mxu0 0
        %400 = vmatpush1.bf16.msra.mxu0 0
        %401 = vmatprep.subr.bf16.mxu0 0
        %402 = vmatpush1.bf16.msra.mxu0 0
        %403 = vmatprep.subr.bf16.mxu0 0
        %404 = vmatpush1.bf16.msra.mxu0 0
        %405 = vmatprep.subr.bf16.mxu0 0
        %406 = vmatpush1.bf16.msra.mxu0 0
        %407 = vmatprep.subr.bf16.mxu0 0
        %408 = vmatpush1.bf16.msra.mxu0 0
        %409 = vmatprep.subr.bf16.mxu0 0
        %410 = vmatpush1.bf16.msra.mxu0 0
        %411 = vmatprep.subr.bf16.mxu0 0
        %412 = vmatpush1.bf16.msra.mxu0 0
        %413 = vmatprep.mubr.bf16.mxu0 0
        %414 = vmatmul.mubr.bf16.gmra.mrb[0].mxu0 %v379
        %v415 = vpop.f32.mrb[0].mxu0
        %v416 = vadd.f32 %v364, %v415
        %v417 = vpop.f32.mrb[0].mxu0
        %v418 = vpop.f32.mrb[0].mxu0
        %v419 = vpop.f32.mrb[0].mxu0
        %420 = vdwg.mxu0
        %v421 = vmul.f32 %v416, 0.35355338
        %v422 = vpack.c.bf16 %v421, %v421
        %v423 = vpack.c.bf16 %v416, %v416
        %425 = vrot.lane.b32.xlu0 %v423, 96
        %v426 = vpop.permute.xlu0 %425
        %vm427 = vcmask 64512
        %v429 = vsel %vm427, %v422, 0
        %v432 = vsel %vm427, %v426, 0
        %434 = vmatprep.subr.bf16.mxu0 0
        %435 = vmatpush1.bf16.xpose.msra.mxu0 %v432
        %436 = vmatprep.subr.bf16.mxu0 0
        %437 = vmatpush1.bf16.xpose.msra.mxu0 0
        %438 = vmatprep.subr.bf16.mxu0 0
        %439 = vmatpush1.bf16.xpose.msra.mxu0 0
        %440 = vmatprep.subr.bf16.mxu0 0
        %441 = vmatpush1.bf16.xpose.msra.mxu0 0
        %442 = vmatprep.subr.bf16.mxu0 0
        %443 = vmatpush1.bf16.xpose.msra.mxu0 0
        %444 = vmatprep.subr.bf16.mxu0 0
        %445 = vmatpush1.bf16.xpose.msra.mxu0 0
        %446 = vmatprep.subr.bf16.mxu0 0
        %447 = vmatpush1.bf16.xpose.msra.mxu0 0
        %448 = vmatprep.subr.bf16.mxu0 0
        %449 = vmatpush1.bf16.xpose.msra.mxu0 0
        %450 = vmatprep.subr.bf16.mxu0 0
        %451 = vmatpush1.bf16.xpose.msra.mxu0 0
        %452 = vmatprep.subr.bf16.mxu0 0
        %453 = vmatpush1.bf16.xpose.msra.mxu0 0
        %454 = vmatprep.subr.bf16.mxu0 0
        %455 = vmatpush1.bf16.xpose.msra.mxu0 0
        %456 = vmatprep.subr.bf16.mxu0 0
        %457 = vmatpush1.bf16.xpose.msra.mxu0 0
        %458 = vmatprep.subr.bf16.mxu0 0
        %459 = vmatpush1.bf16.xpose.msra.mxu0 0
        %460 = vmatprep.subr.bf16.mxu0 0
        %461 = vmatpush1.bf16.xpose.msra.mxu0 0
        %462 = vmatprep.subr.bf16.mxu0 0
        %463 = vmatpush1.bf16.xpose.msra.mxu0 0
        %464 = vmatprep.subr.bf16.mxu0 0
        %465 = vmatpush1.bf16.xpose.msra.mxu0 0
        %466 = vmatprep.mubr.bf16.mxu0 0
        %467 = vmatmul.mubr.bf16.gmra.mrb[0].mxu0 %v429
        %v468 = vpop.f32.mrb[0].mxu0
        %v469 = vadd.f32 0.0, %v468
        %v470 = vpop.f32.mrb[0].mxu0
        %v471 = vpop.f32.mrb[0].mxu0
        %v472 = vpop.f32.mrb[0].mxu0
        %473 = vdwg.mxu0
        %v474 = vsel %vm427, %v469, -inf
        %475 = vmax.xlane.f32.xlu0 %v474
        %v476 = vpop.xlane.xlu0 %475
        %v477 = vsub.f32 %v469, %v476
        %v478 = vmul.f32 %v477, 1.442695
        %v479 = vpow.pop %v478
        %v480 = vsel %vm427, %v479, 0.0
        %481 = vadd.xlane.f32.xlu0 %v480
        %v482 = vpop.xlane.xlu0 %481
        %v483 = vrcp.pop %v482
        %v484 = vmul.f32 %v482, %v483
        %v485 = vsub.f32 2.0, %v484
        %v486 = vmul.f32 %v483, %v485
        %v487 = vmul.f32 %v479, %v486
        %v488 = vpack.c.bf16 %v487, %v487
        %489 = vrot.lane.b32.xlu0 %v423, 64
        %v490 = vpop.permute.xlu0 %489
        %v492 = vsel %vm427, %v488, 0
        %vm494 = vcmask 1043456
        %v496 = vsel %vm494, %v490, 0
        %498 = vmatprep.subr.bf16.mxu0 0
        %499 = vmatpush1.bf16.msra.mxu0 %v496
        %500 = vmatprep.subr.bf16.mxu0 0
        %501 = vmatpush1.bf16.msra.mxu0 0
        %502 = vmatprep.subr.bf16.mxu0 0
        %503 = vmatpush1.bf16.msra.mxu0 0
        %504 = vmatprep.subr.bf16.mxu0 0
        %505 = vmatpush1.bf16.msra.mxu0 0
        %506 = vmatprep.subr.bf16.mxu0 0
        %507 = vmatpush1.bf16.msra.mxu0 0
        %508 = vmatprep.subr.bf16.mxu0 0
        %509 = vmatpush1.bf16.msra.mxu0 0
        %510 = vmatprep.subr.bf16.mxu0 0
        %511 = vmatpush1.bf16.msra.mxu0 0
        %512 = vmatprep.subr.bf16.mxu0 0
        %513 = vmatpush1.bf16.msra.mxu0 0
        %514 = vmatprep.subr.bf16.mxu0 0
        %515 = vmatpush1.bf16.msra.mxu0 0
        %516 = vmatprep.subr.bf16.mxu0 0
        %517 = vmatpush1.bf16.msra.mxu0 0
        %518 = vmatprep.subr.bf16.mxu0 0
        %519 = vmatpush1.bf16.msra.mxu0 0
        %520 = vmatprep.subr.bf16.mxu0 0
        %521 = vmatpush1.bf16.msra.mxu0 0
        %522 = vmatprep.subr.bf16.mxu0 0
        %523 = vmatpush1.bf16.msra.mxu0 0
        %524 = vmatprep.subr.bf16.mxu0 0
        %525 = vmatpush1.bf16.msra.mxu0 0
        %526 = vmatprep.subr.bf16.mxu0 0
        %527 = vmatpush1.bf16.msra.mxu0 0
        %528 = vmatprep.subr.bf16.mxu0 0
        %529 = vmatpush1.bf16.msra.mxu0 0
        %530 = vmatprep.mubr.bf16.mxu0 0
        %531 = vmatmul.mubr.bf16.gmra.mrb[0].mxu0 %v492
        %v532 = vpop.f32.mrb[0].mxu0
        %v533 = vadd.f32 0.0, %v532
        %v534 = vpop.f32.mrb[0].mxu0
        %v535 = vpop.f32.mrb[0].mxu0
        %v536 = vpop.f32.mrb[0].mxu0
        %537 = vdwg.mxu0
        %538 = vst.msk [vmem:[#allocation2] sm:$0xff] %vm427, %v533
        %540 = vrot.lane.b32.xlu0 %v422, 120
        %v541 = vpop.permute.xlu0 %540
        %542 = vrot.lane.b32.xlu0 %v423, 88
        %v543 = vpop.permute.xlu0 %542
        %v545 = vsel %vm427, %v541, 0
        %v548 = vsel %vm427, %v543, 0
        %550 = vmatprep.subr.bf16.mxu0 0
        %551 = vmatpush1.bf16.xpose.msra.mxu0 %v548
        %552 = vmatprep.subr.bf16.mxu0 0
        %553 = vmatpush1.bf16.xpose.msra.mxu0 0
        %554 = vmatprep.subr.bf16.mxu0 0
        %555 = vmatpush1.bf16.xpose.msra.mxu0 0
        %556 = vmatprep.subr.bf16.mxu0 0
        %557 = vmatpush1.bf16.xpose.msra.mxu0 0
        %558 = vmatprep.subr.bf16.mxu0 0
        %559 = vmatpush1.bf16.xpose.msra.mxu0 0
        %560 = vmatprep.subr.bf16.mxu0 0
        %561 = vmatpush1.bf16.xpose.msra.mxu0 0
        %562 = vmatprep.subr.bf16.mxu0 0
        %563 = vmatpush1.bf16.xpose.msra.mxu0 0
        %564 = vmatprep.subr.bf16.mxu0 0
        %565 = vmatpush1.bf16.xpose.msra.mxu0 0
        %566 = vmatprep.subr.bf16.mxu0 0
        %567 = vmatpush1.bf16.xpose.msra.mxu0 0
        %568 = vmatprep.subr.bf16.mxu0 0
        %569 = vmatpush1.bf16.xpose.msra.mxu0 0
        %570 = vmatprep.subr.bf16.mxu0 0
        %571 = vmatpush1.bf16.xpose.msra.mxu0 0
        %572 = vmatprep.subr.bf16.mxu0 0
        %573 = vmatpush1.bf16.xpose.msra.mxu0 0
        %574 = vmatprep.subr.bf16.mxu0 0
        %575 = vmatpush1.bf16.xpose.msra.mxu0 0
        %576 = vmatprep.subr.bf16.mxu0 0
        %577 = vmatpush1.bf16.xpose.msra.mxu0 0
        %578 = vmatprep.subr.bf16.mxu0 0
        %579 = vmatpush1.bf16.xpose.msra.mxu0 0
        %580 = vmatprep.subr.bf16.mxu0 0
        %581 = vmatpush1.bf16.xpose.msra.mxu0 0
        %582 = vmatprep.mubr.bf16.mxu0 0
        %583 = vmatmul.mubr.bf16.gmra.mrb[0].mxu0 %v545
        %v584 = vpop.f32.mrb[0].mxu0
        %v585 = vadd.f32 0.0, %v584
        %v586 = vpop.f32.mrb[0].mxu0
        %v587 = vpop.f32.mrb[0].mxu0
        %v588 = vpop.f32.mrb[0].mxu0
        %589 = vdwg.mxu0
        %v590 = vsel %vm427, %v585, -inf
        %591 = vmax.xlane.f32.xlu0 %v590
        %v592 = vpop.xlane.xlu0 %591
        %v593 = vsub.f32 %v585, %v592
        %v594 = vmul.f32 %v593, 1.442695
        %v595 = vpow.pop %v594
        %v596 = vsel %vm427, %v595, 0.0
        %597 = vadd.xlane.f32.xlu0 %v596
        %v598 = vpop.xlane.xlu0 %597
        %v599 = vrcp.pop %v598
        %v600 = vmul.f32 %v598, %v599
        %v601 = vsub.f32 2.0, %v600
        %v602 = vmul.f32 %v599, %v601
        %v603 = vmul.f32 %v595, %v602
        %v604 = vpack.c.bf16 %v603, %v603
        %605 = vrot.lane.b32.xlu0 %v423, 56
        %v606 = vpop.permute.xlu0 %605
        %v608 = vsel %vm427, %v604, 0
        %v611 = vsel %vm494, %v606, 0
        %613 = vmatprep.subr.bf16.mxu0 0
        %614 = vmatpush1.bf16.msra.mxu0 %v611
        %615 = vmatprep.subr.bf16.mxu0 0
        %616 = vmatpush1.bf16.msra.mxu0 0
        %617 = vmatprep.subr.bf16.mxu0 0
        %618 = vmatpush1.bf16.msra.mxu0 0
        %619 = vmatprep.subr.bf16.mxu0 0
        %620 = vmatpush1.bf16.msra.mxu0 0
        %621 = vmatprep.subr.bf16.mxu0 0
        %622 = vmatpush1.bf16.msra.mxu0 0
        %623 = vmatprep.subr.bf16.mxu0 0
        %624 = vmatpush1.bf16.msra.mxu0 0
        %625 = vmatprep.subr.bf16.mxu0 0
        %626 = vmatpush1.bf16.msra.mxu0 0
        %627 = vmatprep.subr.bf16.mxu0 0
        %628 = vmatpush1.bf16.msra.mxu0 0
        %629 = vmatprep.subr.bf16.mxu0 0
        %630 = vmatpush1.bf16.msra.mxu0 0
        %631 = vmatprep.subr.bf16.mxu0 0
        %632 = vmatpush1.bf16.msra.mxu0 0
        %633 = vmatprep.subr.bf16.mxu0 0
        %634 = vmatpush1.bf16.msra.mxu0 0
        %635 = vmatprep.subr.bf16.mxu0 0
        %636 = vmatpush1.bf16.msra.mxu0 0
        %637 = vmatprep.subr.bf16.mxu0 0
        %638 = vmatpush1.bf16.msra.mxu0 0
        %639 = vmatprep.subr.bf16.mxu0 0
        %640 = vmatpush1.bf16.msra.mxu0 0
        %641 = vmatprep.subr.bf16.mxu0 0
        %642 = vmatpush1.bf16.msra.mxu0 0
        %643 = vmatprep.subr.bf16.mxu0 0
        %644 = vmatpush1.bf16.msra.mxu0 0
        %645 = vmatprep.mubr.bf16.mxu0 0
        %646 = vmatmul.mubr.bf16.gmra.mrb[0].mxu0 %v608
        %v647 = vpop.f32.mrb[0].mxu0
        %v648 = vadd.f32 0.0, %v647
        %v649 = vpop.f32.mrb[0].mxu0
        %v650 = vpop.f32.mrb[0].mxu0
        %v651 = vpop.f32.mrb[0].mxu0
        %652 = vdwg.mxu0
        %654 = vrot.lane.b32.xlu0 %v648, 8
        %v655 = vpop.permute.xlu0 %654
        %vm657 = vcmask 130112
        %658 = vst.msk [vmem:[#allocation2] sm:$0xff] %vm657, %v655
        %659 = vrot.lane.b32.xlu0 %v422, 112
        %v660 = vpop.permute.xlu0 %659
        %661 = vrot.lane.b32.xlu0 %v423, 80
        %v662 = vpop.permute.xlu0 %661
        %v664 = vsel %vm427, %v660, 0
        %v667 = vsel %vm427, %v662, 0
        %669 = vmatprep.subr.bf16.mxu0 0
        %670 = vmatpush1.bf16.xpose.msra.mxu0 %v667
        %671 = vmatprep.subr.bf16.mxu0 0
        %672 = vmatpush1.bf16.xpose.msra.mxu0 0
        %673 = vmatprep.subr.bf16.mxu0 0
        %674 = vmatpush1.bf16.xpose.msra.mxu0 0
        %675 = vmatprep.subr.bf16.mxu0 0
        %676 = vmatpush1.bf16.xpose.msra.mxu0 0
        %677 = vmatprep.subr.bf16.mxu0 0
        %678 = vmatpush1.bf16.xpose.msra.mxu0 0
        %679 = vmatprep.subr.bf16.mxu0 0
        %680 = vmatpush1.bf16.xpose.msra.mxu0 0
        %681 = vmatprep.subr.bf16.mxu0 0
        %682 = vmatpush1.bf16.xpose.msra.mxu0 0
        %683 = vmatprep.subr.bf16.mxu0 0
        %684 = vmatpush1.bf16.xpose.msra.mxu0 0
        %685 = vmatprep.subr.bf16.mxu0 0
        %686 = vmatpush1.bf16.xpose.msra.mxu0 0
        %687 = vmatprep.subr.bf16.mxu0 0
        %688 = vmatpush1.bf16.xpose.msra.mxu0 0
        %689 = vmatprep.subr.bf16.mxu0 0
        %690 = vmatpush1.bf16.xpose.msra.mxu0 0
        %691 = vmatprep.subr.bf16.mxu0 0
        %692 = vmatpush1.bf16.xpose.msra.mxu0 0
        %693 = vmatprep.subr.bf16.mxu0 0
        %694 = vmatpush1.bf16.xpose.msra.mxu0 0
        %695 = vmatprep.subr.bf16.mxu0 0
        %696 = vmatpush1.bf16.xpose.msra.mxu0 0
        %697 = vmatprep.subr.bf16.mxu0 0
        %698 = vmatpush1.bf16.xpose.msra.mxu0 0
        %699 = vmatprep.subr.bf16.mxu0 0
        %700 = vmatpush1.bf16.xpose.msra.mxu0 0
        %701 = vmatprep.mubr.bf16.mxu0 0
        %702 = vmatmul.mubr.bf16.gmra.mrb[0].mxu0 %v664
        %v703 = vpop.f32.mrb[0].mxu0
        %v704 = vadd.f32 0.0, %v703
        %v705 = vpop.f32.mrb[0].mxu0
        %v706 = vpop.f32.mrb[0].mxu0
        %v707 = vpop.f32.mrb[0].mxu0
        %708 = vdwg.mxu0
        %v709 = vsel %vm427, %v704, -inf
        %710 = vmax.xlane.f32.xlu0 %v709
        %v711 = vpop.xlane.xlu0 %710
        %v712 = vsub.f32 %v704, %v711
        %v713 = vmul.f32 %v712, 1.442695
        %v714 = vpow.pop %v713
        %v715 = vsel %vm427, %v714, 0.0
        %716 = vadd.xlane.f32.xlu0 %v715
        %v717 = vpop.xlane.xlu0 %716
        %v718 = vrcp.pop %v717
        %v719 = vmul.f32 %v717, %v718
        %v720 = vsub.f32 2.0, %v719
        %v721 = vmul.f32 %v718, %v720
        %v722 = vmul.f32 %v714, %v721
        %v723 = vpack.c.bf16 %v722, %v722
        %724 = vrot.lane.b32.xlu0 %v423, 48
        %v725 = vpop.permute.xlu0 %724
        %v727 = vsel %vm427, %v723, 0
        %v730 = vsel %vm494, %v725, 0
        %732 = vmatprep.subr.bf16.mxu0 0
        %733 = vmatpush1.bf16.msra.mxu0 %v730
        %734 = vmatprep.subr.bf16.mxu0 0
        %735 = vmatpush1.bf16.msra.mxu0 0
        %736 = vmatprep.subr.bf16.mxu0 0
        %737 = vmatpush1.bf16.msra.mxu0 0
        %738 = vmatprep.subr.bf16.mxu0 0
        %739 = vmatpush1.bf16.msra.mxu0 0
        %740 = vmatprep.subr.bf16.mxu0 0
        %741 = vmatpush1.bf16.msra.mxu0 0
        %742 = vmatprep.subr.bf16.mxu0 0
        %743 = vmatpush1.bf16.msra.mxu0 0
        %744 = vmatprep.subr.bf16.mxu0 0
        %745 = vmatpush1.bf16.msra.mxu0 0
        %746 = vmatprep.subr.bf16.mxu0 0
        %747 = vmatpush1.bf16.msra.mxu0 0
        %748 = vmatprep.subr.bf16.mxu0 0
        %749 = vmatpush1.bf16.msra.mxu0 0
        %750 = vmatprep.subr.bf16.mxu0 0
        %751 = vmatpush1.bf16.msra.mxu0 0
        %752 = vmatprep.subr.bf16.mxu0 0
        %753 = vmatpush1.bf16.msra.mxu0 0
        %754 = vmatprep.subr.bf16.mxu0 0
        %755 = vmatpush1.bf16.msra.mxu0 0
        %756 = vmatprep.subr.bf16.mxu0 0
        %757 = vmatpush1.bf16.msra.mxu0 0
        %758 = vmatprep.subr.bf16.mxu0 0
        %759 = vmatpush1.bf16.msra.mxu0 0
        %760 = vmatprep.subr.bf16.mxu0 0
        %761 = vmatpush1.bf16.msra.mxu0 0
        %762 = vmatprep.subr.bf16.mxu0 0
        %763 = vmatpush1.bf16.msra.mxu0 0
        %764 = vmatprep.mubr.bf16.mxu0 0
        %765 = vmatmul.mubr.bf16.gmra.mrb[0].mxu0 %v727
        %v766 = vpop.f32.mrb[0].mxu0
        %v767 = vadd.f32 0.0, %v766
        %v768 = vpop.f32.mrb[0].mxu0
        %v769 = vpop.f32.mrb[0].mxu0
        %v770 = vpop.f32.mrb[0].mxu0
        %771 = vdwg.mxu0
        %773 = vrot.lane.b32.xlu0 %v767, 16
        %v774 = vpop.permute.xlu0 %773
        %vm776 = vcmask 195712
        %777 = vst.msk [vmem:[#allocation2] sm:$0xff] %vm776, %v774
        %778 = vrot.lane.b32.xlu0 %v422, 104
        %v779 = vpop.permute.xlu0 %778
        %780 = vrot.lane.b32.xlu0 %v423, 72
        %v781 = vpop.permute.xlu0 %780
        %v783 = vsel %vm427, %v779, 0
        %v786 = vsel %vm427, %v781, 0
        %788 = vmatprep.subr.bf16.mxu0 0
        %789 = vmatpush1.bf16.xpose.msra.mxu0 %v786
        %790 = vmatprep.subr.bf16.mxu0 0
        %791 = vmatpush1.bf16.xpose.msra.mxu0 0
        %792 = vmatprep.subr.bf16.mxu0 0
        %793 = vmatpush1.bf16.xpose.msra.mxu0 0
        %794 = vmatprep.subr.bf16.mxu0 0
        %795 = vmatpush1.bf16.xpose.msra.mxu0 0
        %796 = vmatprep.subr.bf16.mxu0 0
        %797 = vmatpush1.bf16.xpose.msra.mxu0 0
        %798 = vmatprep.subr.bf16.mxu0 0
        %799 = vmatpush1.bf16.xpose.msra.mxu0 0
        %800 = vmatprep.subr.bf16.mxu0 0
        %801 = vmatpush1.bf16.xpose.msra.mxu0 0
        %802 = vmatprep.subr.bf16.mxu0 0
        %803 = vmatpush1.bf16.xpose.msra.mxu0 0
        %804 = vmatprep.subr.bf16.mxu0 0
        %805 = vmatpush1.bf16.xpose.msra.mxu0 0
        %806 = vmatprep.subr.bf16.mxu0 0
        %807 = vmatpush1.bf16.xpose.msra.mxu0 0
        %808 = vmatprep.subr.bf16.mxu0 0
        %809 = vmatpush1.bf16.xpose.msra.mxu0 0
        %810 = vmatprep.subr.bf16.mxu0 0
        %811 = vmatpush1.bf16.xpose.msra.mxu0 0
        %812 = vmatprep.subr.bf16.mxu0 0
        %813 = vmatpush1.bf16.xpose.msra.mxu0 0
        %814 = vmatprep.subr.bf16.mxu0 0
        %815 = vmatpush1.bf16.xpose.msra.mxu0 0
        %816 = vmatprep.subr.bf16.mxu0 0
        %817 = vmatpush1.bf16.xpose.msra.mxu0 0
        %818 = vmatprep.subr.bf16.mxu0 0
        %819 = vmatpush1.bf16.xpose.msra.mxu0 0
        %820 = vmatprep.mubr.bf16.mxu0 0
        %821 = vmatmul.mubr.bf16.gmra.mrb[0].mxu0 %v783
        %v822 = vpop.f32.mrb[0].mxu0
        %v823 = vadd.f32 0.0, %v822
        %v824 = vpop.f32.mrb[0].mxu0
        %v825 = vpop.f32.mrb[0].mxu0
        %v826 = vpop.f32.mrb[0].mxu0
        %827 = vdwg.mxu0
        %v828 = vsel %vm427, %v823, -inf
        %829 = vmax.xlane.f32.xlu0 %v828
        %v830 = vpop.xlane.xlu0 %829
        %v831 = vsub.f32 %v823, %v830
        %v832 = vmul.f32 %v831, 1.442695
        %v833 = vpow.pop %v832
        %v834 = vsel %vm427, %v833, 0.0
        %835 = vadd.xlane.f32.xlu0 %v834
        %v836 = vpop.xlane.xlu0 %835
        %v837 = vrcp.pop %v836
        %v838 = vmul.f32 %v836, %v837
        %v839 = vsub.f32 2.0, %v838
        %v840 = vmul.f32 %v837, %v839
        %v841 = vmul.f32 %v833, %v840
        %v842 = vpack.c.bf16 %v841, %v841
        %843 = vrot.lane.b32.xlu0 %v423, 40
        %v844 = vpop.permute.xlu0 %843
        %v846 = vsel %vm427, %v842, 0
        %v849 = vsel %vm494, %v844, 0
        %851 = vmatprep.subr.bf16.mxu0 0
        %852 = vmatpush1.bf16.msra.mxu0 %v849
        %853 = vmatprep.subr.bf16.mxu0 0
        %854 = vmatpush1.bf16.msra.mxu0 0
        %855 = vmatprep.subr.bf16.mxu0 0
        %856 = vmatpush1.bf16.msra.mxu0 0
        %857 = vmatprep.subr.bf16.mxu0 0
        %858 = vmatpush1.bf16.msra.mxu0 0
        %859 = vmatprep.subr.bf16.mxu0 0
        %860 = vmatpush1.bf16.msra.mxu0 0
        %861 = vmatprep.subr.bf16.mxu0 0
        %862 = vmatpush1.bf16.msra.mxu0 0
        %863 = vmatprep.subr.bf16.mxu0 0
        %864 = vmatpush1.bf16.msra.mxu0 0
        %865 = vmatprep.subr.bf16.mxu0 0
        %866 = vmatpush1.bf16.msra.mxu0 0
        %867 = vmatprep.subr.bf16.mxu0 0
        %868 = vmatpush1.bf16.msra.mxu0 0
        %869 = vmatprep.subr.bf16.mxu0 0
        %870 = vmatpush1.bf16.msra.mxu0 0
        %871 = vmatprep.subr.bf16.mxu0 0
        %872 = vmatpush1.bf16.msra.mxu0 0
        %873 = vmatprep.subr.bf16.mxu0 0
        %874 = vmatpush1.bf16.msra.mxu0 0
        %875 = vmatprep.subr.bf16.mxu0 0
        %876 = vmatpush1.bf16.msra.mxu0 0
        %877 = vmatprep.subr.bf16.mxu0 0
        %878 = vmatpush1.bf16.msra.mxu0 0
        %879 = vmatprep.subr.bf16.mxu0 0
        %880 = vmatpush1.bf16.msra.mxu0 0
        %881 = vmatprep.subr.bf16.mxu0 0
        %882 = vmatpush1.bf16.msra.mxu0 0
        %883 = vmatprep.mubr.bf16.mxu0 0
        %884 = vmatmul.mubr.bf16.gmra.mrb[0].mxu0 %v846
        %v885 = vpop.f32.mrb[0].mxu0
        %v886 = vadd.f32 0.0, %v885
        %v887 = vpop.f32.mrb[0].mxu0
        %v888 = vpop.f32.mrb[0].mxu0
        %v889 = vpop.f32.mrb[0].mxu0
        %890 = vdwg.mxu0
        %892 = vrot.lane.b32.xlu0 %v886, 24
        %v893 = vpop.permute.xlu0 %892
        %vm895 = vcmask 261312
        %896 = vst.msk [vmem:[#allocation2] sm:$0xff] %vm895, %v893
        %v897 = vld [vmem:[#allocation2] sm:$0xff]
        %v898 = vpack.c.bf16 %v897, %v897
        %v899 = vld [vmem:[#allocation6] sm:$0xf]
        %v900 = vld [vmem:[#allocation6 + $0x4] sm:$0xf]
        %v901 = vld [vmem:[#allocation6 + $0x8] sm:$0xf]
        %v902 = vld [vmem:[#allocation6 + $0xc] sm:$0xf]
        %v903 = vld [vmem:[#allocation8] sm:$0x1]
        %v905 = vlaneseq
        %v906 = vshrl.u32 %v905, 7
        %v907 = vsub.s32 0, %v906
        %v908 = vrot.slane %v903, %v907
        %v914 = vunpack.c.l.b16 %v899
        %v915 = vunpack.c.l.b16 %v900
        %v916 = vunpack.c.l.b16 %v901
        %v917 = vunpack.c.l.b16 %v902
        %v918 = vpack.c.b16 %v915, %v914
        %v919 = vpack.c.b16 %v917, %v916
        %v923 = vsel %vm323, %v898, 0
        %925 = vmatprep.subr.bf16.mxu0 0
        %926 = vmatpush1.bf16.msra.mxu0 %v918
        %927 = vmatprep.subr.bf16.mxu0 0
        %928 = vmatpush1.bf16.msra.mxu0 %v919
        %929 = vmatprep.subr.bf16.mxu0 0
        %930 = vmatpush1.bf16.msra.mxu0 0
        %931 = vmatprep.subr.bf16.mxu0 0
        %932 = vmatpush1.bf16.msra.mxu0 0
        %933 = vmatprep.subr.bf16.mxu0 0
        %934 = vmatpush1.bf16.msra.mxu0 0
        %935 = vmatprep.subr.bf16.mxu0 0
        %936 = vmatpush1.bf16.msra.mxu0 0
        %937 = vmatprep.subr.bf16.mxu0 0
        %938 = vmatpush1.bf16.msra.mxu0 0
        %939 = vmatprep.subr.bf16.mxu0 0
        %940 = vmatpush1.bf16.msra.mxu0 0
        %941 = vmatprep.subr.bf16.mxu0 0
        %942 = vmatpush1.bf16.msra.mxu0 0
        %943 = vmatprep.subr.bf16.mxu0 0
        %944 = vmatpush1.bf16.msra.mxu0 0
        %945 = vmatprep.subr.bf16.mxu0 0
        %946 = vmatpush1.bf16.msra.mxu0 0
        %947 = vmatprep.subr.bf16.mxu0 0
        %948 = vmatpush1.bf16.msra.mxu0 0
        %949 = vmatprep.subr.bf16.mxu0 0
        %950 = vmatpush1.bf16.msra.mxu0 0
        %951 = vmatprep.subr.bf16.mxu0 0
        %952 = vmatpush1.bf16.msra.mxu0 0
        %953 = vmatprep.subr.bf16.mxu0 0
        %954 = vmatpush1.bf16.msra.mxu0 0
        %955 = vmatprep.subr.bf16.mxu0 0
        %956 = vmatpush1.bf16.msra.mxu0 0
        %957 = vmatprep.mubr.bf16.mxu0 0
        %958 = vmatmul.mubr.bf16.gmra.mrb[0].mxu0 %v923
        %v959 = vpop.f32.mrb[0].mxu0
        %v960 = vadd.f32 %v908, %v959
        %v961 = vpop.f32.mrb[0].mxu0
        %v962 = vpop.f32.mrb[0].mxu0
        %v963 = vpop.f32.mrb[0].mxu0
        %964 = vdwg.mxu0
        %v965 = vadd.f32 %v322, %v960
        %966 = vst.msk [vmem:[%s320] sm:$0xff] %vm323, %v965
        %s967 = sand.u32 %s185, 1
        %s968 = scalar_lea.sflag [#allocation5], %s967
        %s969 = sand.u32 %s185, 1
        %s970 = smul.addr %s969, 8
        %s971 = scalar_lea.vmem [#allocation9], %s970
        // Predicated region
        $region61: #{mhsa_forward.1} parent=47 // pred_check
          %p972 = pneg %p195
        $region62: #{mhsa_forward.1} parent=47 // pred_check_branch
          %974 = sbr.rel (%p972) target = $region64
        $region63: #{mhsa_forward.1} parent=47 // pred_region
          %s976 = ssub.s32 128, 128
          %977 = vsyncadd %s968, %s976
          %s978 = smul.addr %s25, 128
          %s979 = scalar_lea.hbm %s7, %s978
          %s981 = sshll.u32 %s971, 4
          %s982 = int_to_ptr.vmem [resolvable:$true] %s981
          %984 = dma.vmem_to_hbm [thread:$0]  %s982, 128, %s979, %s968
        $region64: #{mhsa_forward.1} parent=47 // pred_fallthru
          _
      $region48: #{mhsa_forward.1} parent=5 // pred_fallthru
        _
      %p985 = scmp.le.s32.totalorder 2, %s20
      // Predicated region
      $region65: #{mhsa_forward.1} parent=5 // pred_check
        %p986 = pneg %p985
      $region66: #{mhsa_forward.1} parent=5 // pred_check_branch
        %988 = sbr.rel (%p986) target = $region68
      $region67: #{mhsa_forward.1} parent=5 // pred_region
        %s989 = ssub.s32 %s20, 2
        // Predicated region
        $region69: #{mhsa_forward.1} parent=67 // pred_check
          %p990 = pneg %p201
        $region70: #{mhsa_forward.1} parent=67 // pred_check_branch
          %992 = sbr.rel (%p990) target = $region72
        $region71: #{mhsa_forward.1} parent=67 // pred_region
          %s993 = sand.u32 %s186, 1
          %s994 = scalar_lea.sflag [#allocation5], %s993
          %s995 = sand.u32 %s186, 1
          %s996 = smul.addr %s995, 8
          %s997 = scalar_lea.vmem [#allocation9], %s996
          %998 = dma.done %s994, 128
        $region72: #{mhsa_forward.1} parent=67 // pred_fallthru
          _
      $region68: #{mhsa_forward.1} parent=5 // pred_fallthru
        _
    $region6: #{mhsa_forward.1} parent=1 // loop_footer
      %s24 = sadd.s32 1, %s20
    $region7: #{mhsa_forward.1} parent=1 // loop_footer_branch
      %19 = sbr.rel target = $region3
    $region8: #{mhsa_forward.1} parent=1 // loop_exit
      _
    %999 = vsyncpa [#allocation4], 1
    %s1000 = scalar_lea.sflag [#allocation4], 1
    %1001 = vsyncpa %s1000, 1
    %1002 = vsyncpa [#allocation7], 1
    %1003 = vsyncpa [#allocation5], 1
    %s1004 = scalar_lea.sflag [#allocation5], 1
    %1005 = vsyncpa %s1004, 1

</llo_original>
